<compile_context>
chip_gen: v7x
topology: tpu7x:2x2x1
jax: 0.10.0
libtpu: 0.0.40
codegen_flags: <defaults>
</compile_context>

<pallas_src>
import jax
import jax.numpy as jnp
import numpy as np
from jax import lax
from jax.experimental import pallas as pl
from jax.experimental.pallas import tpu as pltpu


# ----------------------------------------------------------------------------------
# Kernels (pixels along lanes: x4 is (4*Cin, tile_m), output is (4*Cout, tile_m))
# ----------------------------------------------------------------------------------
def _conv_stats_kernel(x4_ref, w_ref, stats_ref):
    """Pass 1: per-tile partial per-(parity,channel) sum and sum of squares."""
    # w_ref: (4*Cout, 4*Cin) bf16   x4_ref: (4*Cin, tile_m) bf16
    y = jnp.dot(w_ref[...], x4_ref[...], preferred_element_type=jnp.float32)  # (C4, tile_m) f32
    s = jnp.sum(y, axis=1, keepdims=True)          # (C4, 1)
    ss = jnp.sum(y * y, axis=1, keepdims=True)     # (C4, 1)
    stats_ref[...] = jnp.concatenate([s, ss], axis=1).reshape(stats_ref.shape)


def _conv_bn_relu_kernel(x4_ref, w_ref, scale_ref, shift_ref, o_ref):
    """Pass 2: fused conv-transpose taps + BatchNorm(affine) + ReLU for one tile."""
    y = jnp.dot(w_ref[...], x4_ref[...], preferred_element_type=jnp.float32)  # f32 accumulate
    o_ref[...] = jnp.maximum(y * scale_ref[...] + shift_ref[...], 0.0).astype(o_ref.dtype)


# ----------------------------------------------------------------------------------
# Wrapper
# ----------------------------------------------------------------------------------
def _choose_tile_m(M, cap=1024):
    """128-aligned tile <= cap; shrink so the grid has >= 2 steps when possible (v7x)."""
    tile_m = cap
    half = (M + 1) // 2
    if half < tile_m:
        tile_m = max(128, ((half + 127) // 128) * 128)
    return tile_m


def upsampler_block(x_nchw, w, b, gamma, beta, *, eps=1e-3, tile_m=None):
    """x_nchw: (N, Cin, H, W); w: (Cin, Cout, 3, 3) (PyTorch ConvTranspose2d layout).

    Returns (N, Cout, 2H, 2W) matching UpsamplerBlock.forward (training-mode BN).
    `b` is accepted for API parity but is mathematically absorbed by the batch-mean
    subtraction of BatchNorm, so it never enters the computation.
    """
    del b  # conv bias is exactly cancelled by training-mode BatchNorm
    N, Cin, H, W = x_nchw.shape
    Cout = w.shape[1]
    M = N * H * W
    K = 4 * Cin          # [x(i,j) | x(i,j+1) | x(i+1,j) | x(i+1,j+1)] channels
    C4 = 4 * Cout        # [ee | eo | oe | oo] output parities, packed per channel

    # ---- glue: single bf16 4-tap input slab, pixels along lanes: (4*Cin, M) ---------
    xt = jnp.transpose(x_nchw, (1, 0, 2, 3))                       # (Cin, N, H, W)
    xp = jnp.pad(xt, ((0, 0), (0, 0), (0, 1), (0, 1)))             # (Cin, N, H+1, W+1)
    x4 = jnp.concatenate(
        [xp[:, :, :H, :W], xp[:, :, :H, 1:], xp[:, :, 1:, :W], xp[:, :, 1:, 1:]],
        axis=0)                                                    # (4*Cin, N, H, W)
    x4 = x4.reshape(K, M).astype(jnp.bfloat16)
    # TODO(synk): manual-DMA halo variant would avoid this 4x-duplicated slab entirely.

    # ---- tile selection + zero-pad M (padded columns are zero -> stats-neutral) -----
    if tile_m is None:
        tile_m = _choose_tile_m(M)
    assert tile_m % 128 == 0, "tile_m must be a multiple of 128"
    Mp = ((M + tile_m - 1) // tile_m) * tile_m
    if Mp != M:
        x4 = jnp.pad(x4, ((0, 0), (0, Mp - M)))
    G = Mp // tile_m

    # ---- glue: pack the 9 transposed-conv taps into one (4*Cout, 4*Cin) matrix ------
    wt = jnp.transpose(w, (2, 3, 1, 0)).astype(jnp.float32)        # (3, 3, Cout, Cin)
    z = jnp.zeros((Cout, Cin), jnp.float32)
    # rows are the 4 output parities [ee, eo, oe, oo]; column blocks are the 4 taps
    w_ee = jnp.concatenate([wt[1, 1], z,        z,        z       ], axis=1)
    w_eo = jnp.concatenate([wt[1, 2], wt[1, 0], z,        z       ], axis=1)
    w_oe = jnp.concatenate([wt[2, 1], z,        wt[0, 1], z       ], axis=1)
    w_oo = jnp.concatenate([wt[2, 2], wt[2, 0], wt[0, 2], wt[0, 0]], axis=1)
    wbig = jnp.concatenate([w_ee, w_eo, w_oe, w_oo], axis=0).astype(jnp.bfloat16)  # (C4, K)

    x4_spec = pl.BlockSpec((K, tile_m), lambda i: (0, i))
    w_spec = pl.BlockSpec((C4, K), lambda i: (0, 0))
    col_spec = pl.BlockSpec((C4, 1), lambda i: (0, 0))
    cparams = pltpu.CompilerParams(
        dimension_semantics=("parallel",),
        vmem_limit_bytes=32 * 1024 * 1024)

    flops_per_pass = 2 * Mp * K * C4
    stats_cost = pl.CostEstimate(
        flops=flops_per_pass, transcendentals=0,
        bytes_accessed=K * Mp * 2 + C4 * K * 2 + G * C4 * 2 * 4)
    pass2_cost = pl.CostEstimate(
        flops=flops_per_pass, transcendentals=0,
        bytes_accessed=K * Mp * 2 + C4 * K * 2 + C4 * Mp * 2)

    # ---- pass 1: per-tile partial BN statistics --------------------------------------
    stats = pl.pallas_call(
        _conv_stats_kernel,
        out_shape=jax.ShapeDtypeStruct((G, C4, 2), jnp.float32),
        grid=(G,),
        in_specs=[x4_spec, w_spec],
        out_specs=pl.BlockSpec((1, C4, 2), lambda i: (i, 0, 0)),
        compiler_params=cparams,
        cost_estimate=stats_cost,
    )(x4, wbig)

    # tiny cross-tile / cross-parity reduction in JAX (keeps both grids parallel)
    s1 = jnp.sum(stats[:, :, 0], axis=0).reshape(4, Cout).sum(axis=0)   # (Cout,)
    s2 = jnp.sum(stats[:, :, 1], axis=0).reshape(4, Cout).sum(axis=0)   # (Cout,)
    cnt = jnp.float32(4 * M)                                            # true count (ignores pad)
    mean = s1 / cnt
    var = jnp.maximum(s2 / cnt - mean * mean, 0.0)                      # biased variance
    scale = gamma.astype(jnp.float32) * lax.rsqrt(var + eps)
    shift = beta.astype(jnp.float32) - mean * scale
    scale4 = jnp.tile(scale, 4).reshape(C4, 1)
    shift4 = jnp.tile(shift, 4).reshape(C4, 1)

    # ---- pass 2: conv + BN + ReLU, tiled & pipelined, lane-dense bf16 store ----------
    y = pl.pallas_call(
        _conv_bn_relu_kernel,
        out_shape=jax.ShapeDtypeStruct((C4, Mp), jnp.bfloat16),
        grid=(G,),
        in_specs=[x4_spec, w_spec, col_spec, col_spec],
        out_specs=pl.BlockSpec((C4, tile_m), lambda i: (0, i)),
        compiler_params=cparams,
        cost_estimate=pass2_cost,
    )(x4, wbig, scale4, shift4)

    # ---- glue: ONE bf16 transpose doing parity interleave + channels-first ----------
    y = y[:, :M].reshape(2, 2, Cout, N, H, W)       # (row_par, col_par, c, n, i, j)
    y = jnp.transpose(y, (3, 2, 4, 0, 5, 1))        # (n, c, i, row_par, j, col_par)
    y = y.reshape(N, Cout, 2 * H, 2 * W)
    return y.astype(x_nchw.dtype)                   # f32 restored only at the very end


# ----------------------------------------------------------------------------------
# Pure-JAX reference (ConvTranspose2d == lhs-dilated conv with flipped kernel)
# ----------------------------------------------------------------------------------
def reference(x_nchw, w, b, gamma, beta, eps=1e-3):
    x = jnp.transpose(x_nchw, (0, 2, 3, 1)).astype(jnp.float32)
    k = jnp.transpose(w, (2, 3, 0, 1))[::-1, ::-1, :, :]             # HWIO, flipped
    y = lax.conv_general_dilated(
        x, k, window_strides=(1, 1), padding=((1, 2), (1, 2)),
        lhs_dilation=(2, 2), rhs_dilation=(1, 1),
        dimension_numbers=('NHWC', 'HWIO', 'NHWC'))
    y = y + b
    mean = jnp.mean(y, axis=(0, 1, 2))
    var = jnp.mean((y - mean) ** 2, axis=(0, 1, 2))
    y = (y - mean) * lax.rsqrt(var + eps) * gamma + beta
    y = jnp.maximum(y, 0.0)
    return jnp.transpose(y, (0, 3, 1, 2))


if __name__ == "__main__":
    N, Cin, Cout, H, W = 2, 4, 8, 16, 16

    key = jax.random.PRNGKey(0)
    k1, k2, k3, k4, k5 = jax.random.split(key, 5)

    x = jax.random.normal(k1, (N, Cin, H, W), jnp.float32)
    bound = 1.0 / np.sqrt(Cin * 3 * 3)
    w = jax.random.uniform(k2, (Cin, Cout, 3, 3), jnp.float32, -bound, bound)
    b = jax.random.uniform(k3, (Cout,), jnp.float32, -bound, bound)
    gamma = 1.0 + 0.1 * jax.random.normal(k4, (Cout,), jnp.float32)
    beta = 0.1 * jax.random.normal(k5, (Cout,), jnp.float32)
    # TODO(synk): BatchNorm running-stat updates are a training-time side effect and do
    # not affect the forward output; they are not reproduced here.

    # Default tiling: M=512 -> tile_m=256, G=2 (pipelined, 2-TC friendly).
    out = upsampler_block(x, w, b, gamma, beta)
    jax.block_until_ready(out)
    assert out.shape == (N, Cout, 2 * H, 2 * W)

    # Kernel uses bf16 operands/outputs (f32 accumulation); compare against an f32
    # reference evaluated on the same bf16-rounded inputs.
    xq = x.astype(jnp.bfloat16).astype(jnp.float32)
    wq = w.astype(jnp.bfloat16).astype(jnp.float32)
    ref = reference(xq, wq, b, gamma, beta)
    np.testing.assert_allclose(np.asarray(out), np.asarray(ref), atol=1e-2, rtol=1e-2)

    # Also exercise the zero-padded-M path (M=512 -> Mp=768, 2 tiles of 384).
    out2 = upsampler_block(x, w, b, gamma, beta, tile_m=384)
    jax.block_until_ready(out2)
    np.testing.assert_allclose(np.asarray(out2), np.asarray(ref), atol=1e-2, rtol=1e-2)

    print("KERNEL_OK")
</pallas_src>

<mosaic_0001>
module attributes {stable_mosaic.version = 11 : i64} {
  func.func @_conv_stats_kernel(%arg0: i32, %arg1: memref<16x256xbf16, #tpu.memory_space<vmem>>, %arg2: memref<32x16xbf16, #tpu.memory_space<vmem>>, %arg3: memref<1x32x2xf32, #tpu.memory_space<vmem>>) attributes {dimension_semantics = [#tpu.dimension_semantics<parallel>], iteration_bounds = array<i64: 2>, scalar_prefetch = 0 : i64, scratch_operands = 0 : i64, tpu.core_type = #tpu.core_type<tc>, window_params = [{transform_indices = @transform_0, window_bounds = array<i64: 16, 256>}, {pipeline_mode = #tpu.pipeline_mode<synchronous>, transform_indices = @transform_1, window_bounds = array<i64: 32, 16>}, {transform_indices = @transform_2, window_bounds = array<i64: 1, 32, 2>}]} {
    %c0 = arith.constant 0 : index
    %c0_0 = arith.constant 0 : index
    %0 = vector.load %arg2[%c0, %c0_0] : memref<32x16xbf16, #tpu.memory_space<vmem>>, vector<32x16xbf16>
    %c0_1 = arith.constant 0 : index
    %c0_2 = arith.constant 0 : index
    %1 = vector.load %arg1[%c0_1, %c0_2] : memref<16x256xbf16, #tpu.memory_space<vmem>>, vector<16x256xbf16>
    %cst = arith.constant dense<0.000000e+00> : vector<32x256xf32>
    %2 = tpu.matmul %0, %1, %cst {dimension_numbers = #tpu.dot_dimension_numbers<[1], [0], [0], [1], [0, 0, 1, 1], [], []>} : vector<32x16xbf16>, vector<16x256xbf16>, vector<32x256xf32> -> vector<32x256xf32>
    %cst_3 = arith.constant dense<0.000000e+00> : vector<32xf32>
    %3 = vector.multi_reduction <add>, %2, %cst_3 [1] : vector<32x256xf32> to vector<32xf32>
    %4 = vector.shape_cast %3 : vector<32xf32> to vector<32x1xf32>
    %5 = arith.mulf %2, %2 : vector<32x256xf32>
    %cst_4 = arith.constant dense<0.000000e+00> : vector<32xf32>
    %6 = vector.multi_reduction <add>, %5, %cst_4 [1] : vector<32x256xf32> to vector<32xf32>
    %7 = vector.shape_cast %6 : vector<32xf32> to vector<32x1xf32>
    %8 = tpu.concatenate %4, %7 in 1 : vector<32x1xf32>, vector<32x1xf32> -> vector<32x2xf32>
    %9 = vector.shape_cast %8 : vector<32x2xf32> to vector<1x32x2xf32>
    %c0_5 = arith.constant 0 : index
    %c0_6 = arith.constant 0 : index
    %c0_7 = arith.constant 0 : index
    %10 = vector.load %arg3[%c0_5, %c0_6, %c0_7] : memref<1x32x2xf32, #tpu.memory_space<vmem>>, vector<1x32x2xf32>
    tpu.vector_store %arg3[%c0_5, %c0_6, %c0_7], %9 {strides = array<i32>} : memref<1x32x2xf32, #tpu.memory_space<vmem>>, vector<1x32x2xf32>,
    return
  }
  func.func @transform_0(%arg0: i32) -> (i32, i32) {
    %c0_i32 = arith.constant 0 : i32
    %c0_i32_0 = arith.constant 0 : i32
    return %c0_i32, %arg0 : i32, i32
  }
  func.func @transform_1(%arg0: i32) -> (i32, i32) {
    %c0_i32 = arith.constant 0 : i32
    %c0_i32_0 = arith.constant 0 : i32
    %c0_i32_1 = arith.constant 0 : i32
    return %c0_i32, %c0_i32_0 : i32, i32
  }
  func.func @transform_2(%arg0: i32) -> (i32, i32, i32) {
    %c0_i32 = arith.constant 0 : i32
    %c0_i32_0 = arith.constant 0 : i32
    %c0_i32_1 = arith.constant 0 : i32
    return %arg0, %c0_i32, %c0_i32_0 : i32, i32, i32
  }
}

</mosaic_0001>

<llo_original>
// kernel: tpu_custom_call.1
$region0: #{tpu_custom_call.1}
  #allocation0 [shape = 'u32[]', space=smem, size = 0x4, offset = 0x4, fixed_abs, tag = 'smem constant byte address 0x4 - core index']
  #allocation1 [shape = 'u32[144,128]{1,0:T(1,128)}', space=vmem, size = 0x12000, scoped, tag = 'internal scratch']
  %s0 = inlined_call_operand.hbm [shape: bf16[16,512], index: 0, kind: input, shape index: {}]
  %s1 = inlined_call_operand.vmem [shape: bf16[32,16], index: 1, kind: input, shape index: {}]
  %s2 = inlined_call_operand.vmem [shape: f32[2,32,2], index: 2, kind: output, shape index: {}]
  %s3 = sld [smem:[#allocation0]]
  $region45: #{tpu_custom_call.1} parent=0
    _
  %s5 = ssub.s32 1, %s3
  %s6 = scalar_select 0, %s5, %s3
  $region1: #{tpu_custom_call.1} parent=0
    #allocation2 [shape = 'u8[16384]{0}', space=vmem, size = 0x4000, scoped, tag = 'input window, operand 0']
    #allocation3 [shape = 's32[2]{0}', space=sflag, size = 0x8, scoped, tag = 'scoped memory for tpu_custom_call.1']
    %7 = vsyncpa [#allocation3], 0
    %s8 = scalar_lea.sflag [#allocation3], 1
    %9 = vsyncpa %s8, 0
    loop: start=0, step=1, limit=4
    $region2: #{tpu_custom_call.1} parent=1 // loop_pre_header
      _
    $region3: #{tpu_custom_call.1} parent=1 // loop_header
      %s11 = sphi 0, %s15
      %p12 = scmp.ge.s32.totalorder %s11, 4
      %s21 = sphi 0, %s23
      %s24 = sphi 0, %s21
      %s25 = sphi 0, %s24
      %s41 = sphi 0, %s25
      %s45 = sphi 0, %s45
      %s47 = sphi 0, %s45
      %s48 = sphi 0, %s47
      %s62 = sphi 0, %s48
      %s68 = sphi 0, %s70
      %s71 = sphi 0, %s68
      %s72 = sphi 0, %s71
      %s88 = sphi 0, %s72
    $region4: #{tpu_custom_call.1} parent=1 // loop_header_branch
      %14 = sbr.rel (%p12) target = $region8
    $region5: #{tpu_custom_call.1} parent=1 // loop_body
      %s16 = ssub.s32 %s11, 1
      %s17 = ssub.s32 %s11, 2
      %s18 = sadd.s32 %s11, 1
      %s19 = ssub.s32 %s11, %s18
      %p20 = scmp.eq.s32.totalorder %s19, 0
      %s22 = sadd.s32 %s21, 1
      %s23 = scalar_select %p20, %s21, %s22
      %p26 = pneg %p20
      %p27 = scmp.eq.s32.totalorder %s11, 1
      %p28 = por %p26, %p27
      %p29 = scmp.ne.s32.totalorder %s21, %s24
      %p30 = scmp.eq.s32.totalorder %s11, 0
      %p31 = por %p29, %p30
      %p32 = scmp.ne.s32.totalorder %s21, %s24
      %p33 = scmp.eq.s32.totalorder %s16, 1
      %p34 = por %p32, %p33
      %p35 = scmp.ne.s32.totalorder %s24, %s25
      %p36 = scmp.eq.s32.totalorder %s16, 0
      %p37 = por %p35, %p36
      %p38 = scmp.ne.s32.totalorder %s24, %s25
      %p39 = scmp.eq.s32.totalorder %s17, 1
      %p40 = por %p38, %p39
      %p42 = scmp.ne.s32.totalorder %s25, %s41
      %p43 = scmp.eq.s32.totalorder %s17, 0
      %p44 = por %p42, %p43
      %s46 = sadd.s32 %s45, 1
      %p49 = scmp.eq.s32.totalorder %s11, 1
      %p50 = scmp.ne.s32.totalorder %s45, %s47
      %p51 = scmp.eq.s32.totalorder %s11, 0
      %p52 = por %p50, %p51
      %p53 = scmp.ne.s32.totalorder %s45, %s47
      %p54 = scmp.eq.s32.totalorder %s16, 1
      %p55 = por %p53, %p54
      %p56 = scmp.ne.s32.totalorder %s47, %s48
      %p57 = scmp.eq.s32.totalorder %s16, 0
      %p58 = por %p56, %p57
      %p59 = scmp.ne.s32.totalorder %s47, %s48
      %p60 = scmp.eq.s32.totalorder %s17, 1
      %p61 = por %p59, %p60
      %p63 = scmp.ne.s32.totalorder %s48, %s62
      %p64 = scmp.eq.s32.totalorder %s17, 0
      %p65 = por %p63, %p64
      %s66 = ssub.s32 %s11, %s18
      %p67 = scmp.eq.s32.totalorder %s66, 0
      %s69 = sadd.s32 %s68, 1
      %s70 = scalar_select %p67, %s68, %s69
      %p73 = pneg %p67
      %p74 = scmp.eq.s32.totalorder %s11, 1
      %p75 = por %p73, %p74
      %p76 = scmp.ne.s32.totalorder %s68, %s71
      %p77 = scmp.eq.s32.totalorder %s11, 0
      %p78 = por %p76, %p77
      %p79 = scmp.ne.s32.totalorder %s68, %s71
      %p80 = scmp.eq.s32.totalorder %s16, 1
      %p81 = por %p79, %p80
      %p82 = scmp.ne.s32.totalorder %s71, %s72
      %p83 = scmp.eq.s32.totalorder %s16, 0
      %p84 = por %p82, %p83
      %p85 = scmp.ne.s32.totalorder %s71, %s72
      %p86 = scmp.eq.s32.totalorder %s17, 1
      %p87 = por %p85, %p86
      %p89 = scmp.ne.s32.totalorder %s72, %s88
      %p90 = scmp.eq.s32.totalorder %s17, 0
      %p91 = por %p89, %p90
      %p92 = scmp.le.s32.totalorder 1, %s11
      %p93 = scmp.lt.s32.totalorder %s11, 3
      %p94 = pnand %p92, %p93
      %p95 = pneg %p94
      // Predicated region
      $region9: #{tpu_custom_call.1} parent=5 // pred_check
        _
      $region10: #{tpu_custom_call.1} parent=5 // pred_check_branch
        %97 = sbr.rel (%p94) target = $region12
      $region11: #{tpu_custom_call.1} parent=5 // pred_region
        %s98 = ssub.s32 %s11, 1
        // Predicated region
        $region13: #{tpu_custom_call.1} parent=11 // pred_check
          %p99 = pneg %p58
        $region14: #{tpu_custom_call.1} parent=11 // pred_check_branch
          %101 = sbr.rel (%p99) target = $region16
        $region15: #{tpu_custom_call.1} parent=11 // pred_region
          _
        $region16: #{tpu_custom_call.1} parent=11 // pred_fallthru
          _
      $region12: #{tpu_custom_call.1} parent=5 // pred_fallthru
        _
      %p102 = scmp.lt.s32.totalorder %s11, 2
      // Predicated region
      $region17: #{tpu_custom_call.1} parent=5 // pred_check
        %p103 = pneg %p102
      $region18: #{tpu_custom_call.1} parent=5 // pred_check_branch
        %105 = sbr.rel (%p103) target = $region20
      $region19: #{tpu_custom_call.1} parent=5 // pred_region
        // Predicated region
        $region21: #{tpu_custom_call.1} parent=19 // pred_check
          %p106 = pneg %p31
        $region22: #{tpu_custom_call.1} parent=19 // pred_check_branch
          %108 = sbr.rel (%p106) target = $region24
        $region23: #{tpu_custom_call.1} parent=19 // pred_region
          %s109 = sand.u32 %s21, 1
          %s110 = scalar_lea.sflag [#allocation3], %s109
          %s111 = sand.u32 %s21, 1
          %s112 = smul.addr %s111, 16
          %s113 = scalar_lea.vmem [#allocation2], %s112
          %s114 = smul.u32 2, %s11
          %s116 = ssub.s32 256, 256
          %117 = vsyncadd %s110, %s116
          %s118 = smul.addr %s114, 64
          %s119 = scalar_lea.hbm %s0, %s118
          %s120 = sshll.u32 %s113, 4
          %s121 = int_to_ptr.vmem [resolvable:$true] %s120
          %126 = dma.hbm_to_vmem [thread:$0]  %s119, 256, %s121, %s110, 256, 128, 8
        $region24: #{tpu_custom_call.1} parent=19 // pred_fallthru
          _
      $region20: #{tpu_custom_call.1} parent=5 // pred_fallthru
        _
      %p127 = scmp.le.s32.totalorder 1, %s11
      %p128 = scmp.lt.s32.totalorder %s11, 3
      %p129 = pnand %p127, %p128
      %p130 = pneg %p129
      // Predicated region
      $region25: #{tpu_custom_call.1} parent=5 // pred_check
        _
      $region26: #{tpu_custom_call.1} parent=5 // pred_check_branch
        %132 = sbr.rel (%p129) target = $region28
      $region27: #{tpu_custom_call.1} parent=5 // pred_region
        %s133 = ssub.s32 %s11, 1
        %s134 = sand.u32 %s24, 1
        %s135 = scalar_lea.sflag [#allocation3], %s134
        %s136 = sand.u32 %s24, 1
        %s137 = smul.addr %s136, 16
        %s138 = scalar_lea.vmem [#allocation2], %s137
        // Predicated region
        $region29: #{tpu_custom_call.1} parent=27 // pred_check
          %p139 = pneg %p37
        $region30: #{tpu_custom_call.1} parent=27 // pred_check_branch
          %141 = sbr.rel (%p139) target = $region32
        $region31: #{tpu_custom_call.1} parent=27 // pred_region
          %142 = dma.done %s135, 256
        $region32: #{tpu_custom_call.1} parent=27 // pred_fallthru
          _
        %s143 = sand.u32 %s24, 1
        %s144 = scalar_lea.sflag [#allocation3], %s143
        %s145 = sand.u32 %s24, 1
        %s146 = smul.addr %s145, 16
        %s147 = scalar_lea.vmem [#allocation2], %s146
        %p148 = pneg %p37
        %p149 = pneg %p34
        %p150 = pneg %p58
        %p151 = pneg %p55
        %p152 = pneg %p84
        %p153 = pneg %p81
        %p154 = scmp.lt.s32.totalorder %s16, 1
        %s155 = scalar_select %p154, %s16, 1
        %s156 = smul.addr %s155, 4
        %s157 = smul.addr %s156, 8
        %s158 = scalar_lea.vmem %s2, %s157
        %s159 = smul.u32 2, %s16
        %p160 = scmp.lt.s32.totalorder %s16, 1
        %s161 = scalar_select %p160, %s16, 1
        %s162 = smul.addr %s161, 4
        %s163 = smul.addr %s162, 8
        %s164 = scalar_lea.vmem %s2, %s163
        %v166 = vld [vmem:[%s1] sm:$0xf]
        %v167 = vld [vmem:[%s1 + $0x4] sm:$0xf]
        %v168 = vld [vmem:[%s1 + $0x8] sm:$0xf]
        %v169 = vld [vmem:[%s1 + $0xc] sm:$0xf]
        %v170 = vld [vmem:[%s138] sm:$0xff]
        %v171 = vld [vmem:[%s138 + $0x8] sm:$0xff]
        %v176 = vunpack.c.l.b16 %v166
        %v177 = vunpack.c.l.b16 %v167
        %v178 = vunpack.c.l.b16 %v168
        %v179 = vunpack.c.l.b16 %v169
        %v180 = vpack.c.b16 %v177, %v176
        %v181 = vpack.c.b16 %v179, %v178
        %v184 = vunpack.c.l.b16 %v170
        %v185 = vunpack.c.h.b16 %v170
        %v186 = vunpack.c.l.b16 %v171
        %v187 = vunpack.c.h.b16 %v171
        %v188 = vpack.c.b16 %v186, %v184
        %v189 = vpack.c.b16 %v187, %v185
        %vm192 = vcmask 130048
        %v194 = vsel %vm192, %v180, 0
        %v197 = vsel %vm192, %v181, 0
        %199 = vmatprep.subr.bf16.mxu0 %v189
        %200 = vmatpush1.bf16.msra.mxu0 %v188
        %201 = vmatprep.subr.bf16.mxu0 0
        %202 = vmatpush1.bf16.msra.mxu0 0
        %203 = vmatprep.subr.bf16.mxu0 0
        %204 = vmatpush1.bf16.msra.mxu0 0
        %205 = vmatprep.subr.bf16.mxu0 0
        %206 = vmatpush1.bf16.msra.mxu0 0
        %207 = vmatprep.subr.bf16.mxu0 0
        %208 = vmatpush1.bf16.msra.mxu0 0
        %209 = vmatprep.subr.bf16.mxu0 0
        %210 = vmatpush1.bf16.msra.mxu0 0
        %211 = vmatprep.subr.bf16.mxu0 0
        %212 = vmatpush1.bf16.msra.mxu0 0
        %213 = vmatprep.subr.bf16.mxu0 0
        %214 = vmatpush1.bf16.msra.mxu0 0
        %215 = vmatprep.subr.bf16.mxu0 0
        %216 = vmatpush1.bf16.msra.mxu0 0
        %217 = vmatprep.subr.bf16.mxu0 0
        %218 = vmatpush1.bf16.msra.mxu0 0
        %219 = vmatprep.subr.bf16.mxu0 0
        %220 = vmatpush1.bf16.msra.mxu0 0
        %221 = vmatprep.subr.bf16.mxu0 0
        %222 = vmatpush1.bf16.msra.mxu0 0
        %223 = vmatprep.subr.bf16.mxu0 0
        %224 = vmatpush1.bf16.msra.mxu0 0
        %225 = vmatprep.subr.bf16.mxu0 0
        %226 = vmatpush1.bf16.msra.mxu0 0
        %227 = vmatprep.subr.bf16.mxu0 0
        %228 = vmatpush1.bf16.msra.mxu0 0
        %229 = vmatprep.subr.bf16.mxu0 0
        %230 = vmatpush1.bf16.msra.mxu0 0
        %231 = vmatprep.mubr.bf16.mxu0 0
        %232 = vmatmul.mubr.bf16.gmra.mrb[0].mxu0 %v194
        %v233 = vpop.f32.mrb[0].mxu0
        %v234 = vadd.f32 0.0, %v233
        %v235 = vpop.f32.mrb[0].mxu0
        %v236 = vadd.f32 0.0, %v235
        %v237 = vpop.f32.mrb[0].mxu0
        %v238 = vadd.f32 0.0, %v237
        %v239 = vpop.f32.mrb[0].mxu0
        %v240 = vadd.f32 0.0, %v239
        %241 = vmatprep.mubr.bf16.mxu0 0
        %242 = vmatmul.mubr.bf16.gmra.mrb[0].mxu0 %v197
        %v243 = vpop.f32.mrb[0].mxu0
        %v244 = vadd.f32 0.0, %v243
        %v245 = vpop.f32.mrb[0].mxu0
        %v246 = vadd.f32 0.0, %v245
        %v247 = vpop.f32.mrb[0].mxu0
        %v248 = vadd.f32 0.0, %v247
        %v249 = vpop.f32.mrb[0].mxu0
        %v250 = vadd.f32 0.0, %v249
        %251 = vdwg.mxu0
        %v252 = vadd.f32 %v234, %v236
        %253 = vadd.xlane.f32.xlu0 %v252
        %v254 = vpop.xlane.xlu0 %253
        %v255 = vadd.f32 %v238, %v240
        %256 = vadd.xlane.f32.xlu0 %v255
        %v257 = vpop.xlane.xlu0 %256
        %v258 = vadd.f32 %v244, %v246
        %259 = vadd.xlane.f32.xlu0 %v258
        %v260 = vpop.xlane.xlu0 %259
        %v261 = vadd.f32 %v248, %v250
        %262 = vadd.xlane.f32.xlu0 %v261
        %v263 = vpop.xlane.xlu0 %262
        %v264 = vmul.f32 %v234, %v234
        %v265 = vmul.f32 %v236, %v236
        %v266 = vmul.f32 %v238, %v238
        %v267 = vmul.f32 %v240, %v240
        %v268 = vmul.f32 %v244, %v244
        %v269 = vmul.f32 %v246, %v246
        %v270 = vmul.f32 %v248, %v248
        %v271 = vmul.f32 %v250, %v250
        %v272 = vadd.f32 %v264, %v265
        %273 = vadd.xlane.f32.xlu0 %v272
        %v274 = vpop.xlane.xlu0 %273
        %v275 = vadd.f32 %v266, %v267
        %276 = vadd.xlane.f32.xlu0 %v275
        %v277 = vpop.xlane.xlu0 %276
        %v278 = vadd.f32 %v268, %v269
        %279 = vadd.xlane.f32.xlu0 %v278
        %v280 = vpop.xlane.xlu0 %279
        %v281 = vadd.f32 %v270, %v271
        %282 = vadd.xlane.f32.xlu0 %v281
        %v283 = vpop.xlane.xlu0 %282
        %vm284 = vcmask 7168
        %v285 = vsel %vm284, %v254, %v274
        %v286 = vsel %vm284, %v257, %v277
        %v287 = vsel %vm284, %v260, %v280
        %v288 = vsel %vm284, %v263, %v283
        %vm289 = vcmask 15360
        %290 = vst.msk [vmem:[%s164] sm:$0xff] %vm289, %v285
        %291 = vst.msk [vmem:[%s164 + $0x8] sm:$0xff] %vm289, %v286
        %292 = vst.msk [vmem:[%s164 + $0x10] sm:$0xff] %vm289, %v287
        %293 = vst.msk [vmem:[%s164 + $0x18] sm:$0xff] %vm289, %v288
        %p294 = scmp.lt.s32.totalorder %s16, 1
        %s295 = scalar_select %p294, %s16, 1
        %s296 = smul.addr %s295, 4
        %s297 = smul.addr %s296, 8
        %s298 = scalar_lea.vmem %s2, %s297
        // Predicated region
        $region33: #{tpu_custom_call.1} parent=27 // pred_check
          %p299 = pneg %p81
        $region34: #{tpu_custom_call.1} parent=27 // pred_check_branch
          %301 = sbr.rel (%p299) target = $region36
        $region35: #{tpu_custom_call.1} parent=27 // pred_region
          _
        $region36: #{tpu_custom_call.1} parent=27 // pred_fallthru
          _
      $region28: #{tpu_custom_call.1} parent=5 // pred_fallthru
        _
      %p302 = scmp.le.s32.totalorder 2, %s11
      // Predicated region
      $region37: #{tpu_custom_call.1} parent=5 // pred_check
        %p303 = pneg %p302
      $region38: #{tpu_custom_call.1} parent=5 // pred_check_branch
        %305 = sbr.rel (%p303) target = $region40
      $region39: #{tpu_custom_call.1} parent=5 // pred_region
        %s306 = ssub.s32 %s11, 2
        // Predicated region
        $region41: #{tpu_custom_call.1} parent=39 // pred_check
          %p307 = pneg %p87
        $region42: #{tpu_custom_call.1} parent=39 // pred_check_branch
          %309 = sbr.rel (%p307) target = $region44
        $region43: #{tpu_custom_call.1} parent=39 // pred_region
          %p310 = scmp.lt.s32.totalorder %s17, 1
          %s311 = scalar_select %p310, %s17, 1
          %s312 = smul.addr %s311, 4
          %s313 = smul.addr %s312, 8
          %s314 = scalar_lea.vmem %s2, %s313
        $region44: #{tpu_custom_call.1} parent=39 // pred_fallthru
          _
      $region40: #{tpu_custom_call.1} parent=5 // pred_fallthru
        _
    $region6: #{tpu_custom_call.1} parent=1 // loop_footer
      %s15 = sadd.s32 1, %s11
    $region7: #{tpu_custom_call.1} parent=1 // loop_footer_branch
      %10 = sbr.rel target = $region3
    $region8: #{tpu_custom_call.1} parent=1 // loop_exit
      _
    %315 = vsyncpa [#allocation3], 1
    %s316 = scalar_lea.sflag [#allocation3], 1
    %317 = vsyncpa %s316, 1

</llo_original>
